<compile_context>
chip_gen: v6e
topology: v6e:2x2x1
jax: 0.10.0
libtpu: 0.0.40
codegen_flags: <defaults>
</compile_context>

<pallas_src>
import jax
import jax.numpy as jnp
from jax.experimental import pallas as pl
from jax.experimental.pallas import tpu as pltpu

IN_DIM = 100
HID_DIM = 128
OUT_DIM = 784

IN_PAD = 128      # contraction dim zero-padded 100 -> 128 (numerically exact)
DEFAULT_TM = 512  # batch tile (multiple of 16 for bf16 sublane packing)


def generator_kernel(x_ref, w1_ref, b1_ref, w2_ref, b2_ref, o_ref):
    # fc1 + ReLU : bf16 operands, f32 accumulation on the MXU.
    h = jnp.dot(x_ref[...], w1_ref[...], preferred_element_type=jnp.float32)
    h = jnp.maximum(h + b1_ref[...], 0.0)
    # fc2 : hidden cast back to bf16 for the second MXU pass, accumulate f32.
    o = jnp.dot(h.astype(w2_ref.dtype), w2_ref[...],
                preferred_element_type=jnp.float32)
    o = o + b2_ref[...]
    # sigmoid(o) = 0.5 * tanh(0.5 * o) + 0.5 : one EUP transcendental per
    # element (instead of exp + reciprocal), f32 math, bf16 store.
    o_ref[...] = (0.5 * jnp.tanh(0.5 * o) + 0.5).astype(o_ref.dtype)


def generator_forward(x, w1, b1, w2, b2, *, tm=DEFAULT_TM):
    """x: (B, 100) f32; w1: (100, 128); b1: (128,)/(1,128);
    w2: (128, 784); b2: (784,)/(1,784). Returns (B, 784) bf16."""
    B = x.shape[0]
    tm = min(tm, B)            # B <= tm -> single full block (legal: full dim)
    grid_m = pl.cdiv(B, tm)    # partial last tile handled by Pallas masking

    # Wrapper-side pad/cast (small: only x and the tiny weights).
    xp = jnp.zeros((B, IN_PAD), jnp.bfloat16).at[:, :IN_DIM].set(
        x.astype(jnp.bfloat16))
    w1p = jnp.zeros((IN_PAD, HID_DIM), jnp.bfloat16).at[:IN_DIM, :].set(
        w1.astype(jnp.bfloat16))
    b1p = jnp.asarray(b1, jnp.float32).reshape(1, HID_DIM)
    w2p = jnp.asarray(w2, jnp.bfloat16).reshape(HID_DIM, OUT_DIM)
    b2p = jnp.asarray(b2, jnp.float32).reshape(1, OUT_DIM)

    cost = pl.CostEstimate(
        flops=2 * B * (IN_PAD * HID_DIM + HID_DIM * OUT_DIM),
        transcendentals=B * OUT_DIM,
        bytes_accessed=(B * IN_PAD * 2            # x (bf16 in)
                        + B * OUT_DIM * 2         # out (bf16 write)
                        + IN_PAD * HID_DIM * 2 + HID_DIM * OUT_DIM * 2
                        + (HID_DIM + OUT_DIM) * 4),
    )

    out = pl.pallas_call(
        generator_kernel,
        out_shape=jax.ShapeDtypeStruct((B, OUT_DIM), jnp.bfloat16),
        grid_spec=pltpu.PrefetchScalarGridSpec(
            num_scalar_prefetch=0,
            grid=(grid_m,),
            in_specs=[
                pl.BlockSpec((tm, IN_PAD), lambda i: (i, 0)),
                pl.BlockSpec((IN_PAD, HID_DIM), lambda i: (0, 0)),
                pl.BlockSpec((1, HID_DIM), lambda i: (0, 0)),
                pl.BlockSpec((HID_DIM, OUT_DIM), lambda i: (0, 0)),
                pl.BlockSpec((1, OUT_DIM), lambda i: (0, 0)),
            ],
            out_specs=pl.BlockSpec((tm, OUT_DIM), lambda i: (i, 0)),
        ),
        compiler_params=pltpu.CompilerParams(
            dimension_semantics=("parallel",),   # megacore split on v7x
        ),
        cost_estimate=cost,
    )(xp, w1p, b1p, w2p, b2p)
    return out


def init_params(key):
    # Deterministic synthetic init, mirroring weight_init(mean=0, std=0.075**2).
    k1, k2, k3, k4 = jax.random.split(key, 4)
    std = 0.075 ** 2
    w1 = jax.random.normal(k1, (IN_DIM, HID_DIM), jnp.float32) * std
    b1 = jax.random.normal(k2, (1, HID_DIM), jnp.float32) * std
    w2 = jax.random.normal(k3, (HID_DIM, OUT_DIM), jnp.float32) * std
    b2 = jax.random.normal(k4, (1, OUT_DIM), jnp.float32) * std
    return w1, b1, w2, b2


def reference_forward(x, w1, b1, w2, b2):
    h = jnp.maximum(x @ w1 + b1, 0.0)
    return jax.nn.sigmoid(h @ w2 + b2)


if __name__ == "__main__":
    key = jax.random.PRNGKey(0)
    kx, kp = jax.random.split(key)
    B = 8  # small batch smoke test (single full block, grid=1)
    x = jax.random.normal(kx, (B, IN_DIM), jnp.float32)
    w1, b1, w2, b2 = init_params(kp)

    out = generator_forward(x, w1, b1, w2, b2)
    out = jax.block_until_ready(out)

    ref = reference_forward(x, w1, b1, w2, b2)
    assert out.shape == (B, OUT_DIM)
    # bf16 operands / bf16 output -> looser tolerance than pure f32.
    assert jnp.allclose(out.astype(jnp.float32), ref, atol=2e-2, rtol=2e-2)
    print("KERNEL_OK")
</pallas_src>

<mosaic_0001>
module attributes {stable_mosaic.version = 11 : i64} {
  func.func @generator_kernel(%arg0: i32, %arg1: memref<8x128xbf16, #tpu.memory_space<vmem>>, %arg2: memref<128x128xbf16, #tpu.memory_space<vmem>>, %arg3: memref<1x128xf32, #tpu.memory_space<vmem>>, %arg4: memref<128x784xbf16, #tpu.memory_space<vmem>>, %arg5: memref<1x784xf32, #tpu.memory_space<vmem>>, %arg6: memref<8x784xbf16, #tpu.memory_space<vmem>>) attributes {dimension_semantics = [#tpu.dimension_semantics<parallel>], iteration_bounds = array<i64: 1>, scalar_prefetch = 0 : i64, scratch_operands = 0 : i64, tpu.core_type = #tpu.core_type<tc>, window_params = [{transform_indices = @transform_0, window_bounds = array<i64: 8, 128>}, {pipeline_mode = #tpu.pipeline_mode<synchronous>, transform_indices = @transform_1, window_bounds = array<i64: 128, 128>}, {pipeline_mode = #tpu.pipeline_mode<synchronous>, transform_indices = @transform_2, window_bounds = array<i64: 1, 128>}, {pipeline_mode = #tpu.pipeline_mode<synchronous>, transform_indices = @transform_3, window_bounds = array<i64: 128, 784>}, {pipeline_mode = #tpu.pipeline_mode<synchronous>, transform_indices = @transform_4, window_bounds = array<i64: 1, 784>}, {transform_indices = @transform_5, window_bounds = array<i64: 8, 784>}]} {
    %c0 = arith.constant 0 : index
    %c0_0 = arith.constant 0 : index
    %0 = vector.load %arg1[%c0, %c0_0] : memref<8x128xbf16, #tpu.memory_space<vmem>>, vector<8x128xbf16>
    %c0_1 = arith.constant 0 : index
    %c0_2 = arith.constant 0 : index
    %1 = vector.load %arg2[%c0_1, %c0_2] : memref<128x128xbf16, #tpu.memory_space<vmem>>, vector<128x128xbf16>
    %cst = arith.constant dense<0.000000e+00> : vector<8x128xf32>
    %2 = tpu.matmul %0, %1, %cst {dimension_numbers = #tpu.dot_dimension_numbers<[1], [0], [0], [1], [0, 0, 1, 1], [], []>} : vector<8x128xbf16>, vector<128x128xbf16>, vector<8x128xf32> -> vector<8x128xf32>
    %c0_3 = arith.constant 0 : index
    %c0_4 = arith.constant 0 : index
    %3 = vector.load %arg3[%c0_3, %c0_4] : memref<1x128xf32, #tpu.memory_space<vmem>>, vector<1x128xf32>
    %4 = vector.broadcast %3 : vector<1x128xf32> to vector<8x128xf32>
    %5 = arith.addf %2, %4 : vector<8x128xf32>
    %cst_5 = arith.constant 0.000000e+00 : f32
    %6 = vector.broadcast %cst_5 : f32 to vector<8x128xf32>
    %7 = arith.maximumf %5, %6 : vector<8x128xf32>
    %8 = arith.truncf %7 : vector<8x128xf32> to vector<8x128xbf16>
    %c0_6 = arith.constant 0 : index
    %c0_7 = arith.constant 0 : index
    %9 = vector.load %arg4[%c0_6, %c0_7] : memref<128x784xbf16, #tpu.memory_space<vmem>>, vector<128x784xbf16>
    %cst_8 = arith.constant dense<0.000000e+00> : vector<8x784xf32>
    %10 = tpu.matmul %8, %9, %cst_8 {dimension_numbers = #tpu.dot_dimension_numbers<[1], [0], [0], [1], [0, 0, 1, 1], [], []>} : vector<8x128xbf16>, vector<128x784xbf16>, vector<8x784xf32> -> vector<8x784xf32>
    %c0_9 = arith.constant 0 : index
    %c0_10 = arith.constant 0 : index
    %11 = vector.load %arg5[%c0_9, %c0_10] : memref<1x784xf32, #tpu.memory_space<vmem>>, vector<1x784xf32>
    %12 = vector.broadcast %11 : vector<1x784xf32> to vector<8x784xf32>
    %13 = arith.addf %10, %12 : vector<8x784xf32>
    %cst_11 = arith.constant 5.000000e-01 : f32
    %14 = vector.broadcast %cst_11 : f32 to vector<8x784xf32>
    %15 = arith.mulf %14, %13 : vector<8x784xf32>
    %16 = math.tanh %15 : vector<8x784xf32>
    %cst_12 = arith.constant 5.000000e-01 : f32
    %17 = vector.broadcast %cst_12 : f32 to vector<8x784xf32>
    %18 = arith.mulf %17, %16 : vector<8x784xf32>
    %cst_13 = arith.constant 5.000000e-01 : f32
    %19 = vector.broadcast %cst_13 : f32 to vector<8x784xf32>
    %20 = arith.addf %18, %19 : vector<8x784xf32>
    %21 = arith.truncf %20 : vector<8x784xf32> to vector<8x784xbf16>
    %c0_14 = arith.constant 0 : index
    %c0_15 = arith.constant 0 : index
    %22 = vector.load %arg6[%c0_14, %c0_15] : memref<8x784xbf16, #tpu.memory_space<vmem>>, vector<8x784xbf16>
    tpu.vector_store %arg6[%c0_14, %c0_15], %21 {strides = array<i32>} : memref<8x784xbf16, #tpu.memory_space<vmem>>, vector<8x784xbf16>,
    return
  }
  func.func @transform_0(%arg0: i32) -> (i32, i32) {
    %c0_i32 = arith.constant 0 : i32
    %c0_i32_0 = arith.constant 0 : i32
    return %arg0, %c0_i32 : i32, i32
  }
  func.func @transform_1(%arg0: i32) -> (i32, i32) {
    %c0_i32 = arith.constant 0 : i32
    %c0_i32_0 = arith.constant 0 : i32
    %c0_i32_1 = arith.constant 0 : i32
    return %c0_i32, %c0_i32_0 : i32, i32
  }
  func.func @transform_2(%arg0: i32) -> (i32, i32) {
    %c0_i32 = arith.constant 0 : i32
    %c0_i32_0 = arith.constant 0 : i32
    %c0_i32_1 = arith.constant 0 : i32
    return %c0_i32, %c0_i32_0 : i32, i32
  }
  func.func @transform_3(%arg0: i32) -> (i32, i32) {
    %c0_i32 = arith.constant 0 : i32
    %c0_i32_0 = arith.constant 0 : i32
    %c0_i32_1 = arith.constant 0 : i32
    return %c0_i32, %c0_i32_0 : i32, i32
  }
  func.func @transform_4(%arg0: i32) -> (i32, i32) {
    %c0_i32 = arith.constant 0 : i32
    %c0_i32_0 = arith.constant 0 : i32
    %c0_i32_1 = arith.constant 0 : i32
    return %c0_i32, %c0_i32_0 : i32, i32
  }
  func.func @transform_5(%arg0: i32) -> (i32, i32) {
    %c0_i32 = arith.constant 0 : i32
    %c0_i32_0 = arith.constant 0 : i32
    return %arg0, %c0_i32 : i32, i32
  }
}

</mosaic_0001>

<llo_original>
// kernel: tpu_custom_call.1
$region0: #{tpu_custom_call.1}
  #allocation0 [shape = 'u32[]', space=smem, size = 0x4, offset = 0x4, fixed_abs, tag = 'smem constant byte address 0x4 - core index']
  #allocation1 [shape = 'u32[144,128]{1,0:T(1,128)}', space=vmem, size = 0x12000, scoped, tag = 'internal scratch']
  %s0 = inlined_call_operand.vmem [shape: bf16[8,128], index: 0, kind: input, shape index: {}]
  %s1 = inlined_call_operand.vmem [shape: bf16[128,128], index: 1, kind: input, shape index: {}]
  %s2 = inlined_call_operand.vmem [shape: f32[1,128], index: 2, kind: input, shape index: {}]
  %s3 = inlined_call_operand.vmem [shape: bf16[128,784], index: 3, kind: input, shape index: {}]
  %s4 = inlined_call_operand.vmem [shape: f32[1,784], index: 4, kind: input, shape index: {}]
  %s5 = inlined_call_operand.hbm [shape: bf16[8,784], index: 5, kind: output, shape index: {}]
  %s6 = sld [smem:[#allocation0]]
  $region30: #{tpu_custom_call.1} parent=0
    _
  %s8 = ssub.s32 1, %s6
  %s9 = scalar_select 0, %s8, %s6
  $region1: #{tpu_custom_call.1} parent=0
    #allocation2 [shape = 'u8[14336]{0}', space=vmem, size = 0x3800, scoped, tag = 'output window, operand 0, single buffered']
    #allocation3 [shape = 's32[1]{0}', space=sflag, size = 0x4, scoped, tag = 'scoped memory for tpu_custom_call.1']
    %10 = vsyncpa [#allocation3], 0
    // Predicated region
    $region2: #{tpu_custom_call.1} parent=1 // pred_check
      _
    $region3: #{tpu_custom_call.1} parent=1 // pred_check_branch
      %12 = sbr.rel (0) target = $region5
    $region4: #{tpu_custom_call.1} parent=1 // pred_region
      _
    $region5: #{tpu_custom_call.1} parent=1 // pred_fallthru
      _
    // Predicated region
    $region6: #{tpu_custom_call.1} parent=1 // pred_check
      _
    $region7: #{tpu_custom_call.1} parent=1 // pred_check_branch
      %14 = sbr.rel (0) target = $region9
    $region8: #{tpu_custom_call.1} parent=1 // pred_region
      _
    $region9: #{tpu_custom_call.1} parent=1 // pred_fallthru
      _
    // Predicated region
    $region10: #{tpu_custom_call.1} parent=1 // pred_check
      _
    $region11: #{tpu_custom_call.1} parent=1 // pred_check_branch
      %16 = sbr.rel (0) target = $region13
    $region12: #{tpu_custom_call.1} parent=1 // pred_region
      _
    $region13: #{tpu_custom_call.1} parent=1 // pred_fallthru
      _
    // Predicated region
    $region14: #{tpu_custom_call.1} parent=1 // pred_check
      _
    $region15: #{tpu_custom_call.1} parent=1 // pred_check_branch
      %18 = sbr.rel (0) target = $region17
    $region16: #{tpu_custom_call.1} parent=1 // pred_region
      _
    $region17: #{tpu_custom_call.1} parent=1 // pred_fallthru
      _
    // Predicated region
    $region18: #{tpu_custom_call.1} parent=1 // pred_check
      _
    $region19: #{tpu_custom_call.1} parent=1 // pred_check_branch
      %20 = sbr.rel (0) target = $region21
    $region20: #{tpu_custom_call.1} parent=1 // pred_region
      _
    $region21: #{tpu_custom_call.1} parent=1 // pred_fallthru
      _
    %v22 = vld [vmem:[%s0] sm:$0xf]
    %v23 = vld [vmem:[%s1] sm:$0xf]
    %v24 = vld [vmem:[%s1 + $0x4] sm:$0xf]
    %v25 = vld [vmem:[%s1 + $0x8] sm:$0xf]
    %v26 = vld [vmem:[%s1 + $0xc] sm:$0xf]
    %v27 = vld [vmem:[%s1 + $0x10] sm:$0xf]
    %v28 = vld [vmem:[%s1 + $0x14] sm:$0xf]
    %v29 = vld [vmem:[%s1 + $0x18] sm:$0xf]
    %v30 = vld [vmem:[%s1 + $0x1c] sm:$0xf]
    %v31 = vld [vmem:[%s1 + $0x20] sm:$0xf]
    %v32 = vld [vmem:[%s1 + $0x24] sm:$0xf]
    %v33 = vld [vmem:[%s1 + $0x28] sm:$0xf]
    %v34 = vld [vmem:[%s1 + $0x2c] sm:$0xf]
    %v35 = vld [vmem:[%s1 + $0x30] sm:$0xf]
    %v36 = vld [vmem:[%s1 + $0x34] sm:$0xf]
    %v37 = vld [vmem:[%s1 + $0x38] sm:$0xf]
    %v38 = vld [vmem:[%s1 + $0x3c] sm:$0xf]
    %v39 = vld [vmem:[%s2] sm:$0x1]
    %v41 = vlaneseq
    %v42 = vshrl.u32 %v41, 7
    %v43 = vsub.s32 0, %v42
    %v44 = vrot.slane %v39, %v43
    %v62 = vunpack.c.l.b16 %v23
    %v63 = vunpack.c.l.b16 %v24
    %v64 = vunpack.c.l.b16 %v25
    %v65 = vunpack.c.l.b16 %v26
    %v66 = vunpack.c.l.b16 %v27
    %v67 = vunpack.c.l.b16 %v28
    %v68 = vunpack.c.l.b16 %v29
    %v69 = vunpack.c.l.b16 %v30
    %v70 = vunpack.c.l.b16 %v31
    %v71 = vunpack.c.l.b16 %v32
    %v72 = vunpack.c.l.b16 %v33
    %v73 = vunpack.c.l.b16 %v34
    %v74 = vunpack.c.l.b16 %v35
    %v75 = vunpack.c.l.b16 %v36
    %v76 = vunpack.c.l.b16 %v37
    %v77 = vunpack.c.l.b16 %v38
    %v78 = vpack.c.b16 %v63, %v62
    %v79 = vpack.c.b16 %v65, %v64
    %v80 = vpack.c.b16 %v67, %v66
    %v81 = vpack.c.b16 %v69, %v68
    %v82 = vpack.c.b16 %v71, %v70
    %v83 = vpack.c.b16 %v73, %v72
    %v84 = vpack.c.b16 %v75, %v74
    %v85 = vpack.c.b16 %v77, %v76
    %94 = vmatprep.subr.bf16.mxu0 0
    %95 = vmatpush1.bf16.msra.mxu0 %v85
    %96 = vmatprep.subr.bf16.mxu0 0
    %97 = vmatpush1.bf16.msra.mxu0 %v84
    %98 = vmatprep.subr.bf16.mxu0 0
    %99 = vmatpush1.bf16.msra.mxu0 %v83
    %100 = vmatprep.subr.bf16.mxu0 0
    %101 = vmatpush1.bf16.msra.mxu0 %v82
    %102 = vmatprep.subr.bf16.mxu0 0
    %103 = vmatpush1.bf16.msra.mxu0 %v81
    %104 = vmatprep.subr.bf16.mxu0 0
    %105 = vmatpush1.bf16.msra.mxu0 %v80
    %106 = vmatprep.subr.bf16.mxu0 0
    %107 = vmatpush1.bf16.msra.mxu0 %v79
    %108 = vmatprep.subr.bf16.mxu0 0
    %109 = vmatpush1.bf16.msra.mxu0 %v78
    %110 = vmatprep.subr.bf16.mxu0 0
    %111 = vmatpush2.bf16.msra.mxu0 0
    %112 = vmatprep.subr.bf16.mxu0 0
    %113 = vmatpush2.bf16.msra.mxu0 0
    %114 = vmatprep.subr.bf16.mxu0 0
    %115 = vmatpush2.bf16.msra.mxu0 0
    %116 = vmatprep.subr.bf16.mxu0 0
    %117 = vmatpush2.bf16.msra.mxu0 0
    %118 = vmatprep.subr.bf16.mxu0 0
    %119 = vmatpush2.bf16.msra.mxu0 0
    %120 = vmatprep.subr.bf16.mxu0 0
    %121 = vmatpush2.bf16.msra.mxu0 0
    %122 = vmatprep.subr.bf16.mxu0 0
    %123 = vmatpush2.bf16.msra.mxu0 0
    %124 = vmatprep.subr.bf16.mxu0 0
    %125 = vmatpush2.bf16.msra.mxu0 0
    %126 = vmatprep.mubr.bf16.mxu0 0
    %127 = vmatmul.mubr.bf16.gmra.mxu0 %v22
    %v128 = vpop.f32.mrf.mxu0
    %v129 = vadd.f32 %v44, %v128
    %v130 = vpop.f32.mrf.mxu0
    %v131 = vpop.f32.mrf.mxu0
    %v132 = vpop.f32.mrf.mxu0
    %133 = vdwg.mxu0
    %v134 = vmax.f32 %v129, 0.0
    %v135 = vpack.c.bf16 %v134, %v134
    %v136 = vld [vmem:[%s3] sm:$0xff]
    %v137 = vld [vmem:[%s3 + $0x8] sm:$0xff]
    %v138 = vld [vmem:[%s3 + $0x10] sm:$0xff]
    %v139 = vld [vmem:[%s3 + $0x18] sm:$0xf]
    %v140 = vld [vmem:[%s3 + $0x1c] sm:$0xff]
    %v141 = vld [vmem:[%s3 + $0x24] sm:$0xff]
    %v142 = vld [vmem:[%s3 + $0x2c] sm:$0xff]
    %v143 = vld [vmem:[%s3 + $0x34] sm:$0xf]
    %v144 = vld [vmem:[%s3 + $0x38] sm:$0xff]
    %v145 = vld [vmem:[%s3 + $0x40] sm:$0xff]
    %v146 = vld [vmem:[%s3 + $0x48] sm:$0xff]
    %v147 = vld [vmem:[%s3 + $0x50] sm:$0xf]
    %v148 = vld [vmem:[%s3 + $0x54] sm:$0xff]
    %v149 = vld [vmem:[%s3 + $0x5c] sm:$0xff]
    %v150 = vld [vmem:[%s3 + $0x64] sm:$0xff]
    %v151 = vld [vmem:[%s3 + $0x6c] sm:$0xf]
    %v152 = vld [vmem:[%s3 + $0x70] sm:$0xff]
    %v153 = vld [vmem:[%s3 + $0x78] sm:$0xff]
    %v154 = vld [vmem:[%s3 + $0x80] sm:$0xff]
    %v155 = vld [vmem:[%s3 + $0x88] sm:$0xf]
    %v156 = vld [vmem:[%s3 + $0x8c] sm:$0xff]
    %v157 = vld [vmem:[%s3 + $0x94] sm:$0xff]
    %v158 = vld [vmem:[%s3 + $0x9c] sm:$0xff]
    %v159 = vld [vmem:[%s3 + $0xa4] sm:$0xf]
    %v160 = vld [vmem:[%s3 + $0xa8] sm:$0xff]
    %v161 = vld [vmem:[%s3 + $0xb0] sm:$0xff]
    %v162 = vld [vmem:[%s3 + $0xb8] sm:$0xff]
    %v163 = vld [vmem:[%s3 + $0xc0] sm:$0xf]
    %v164 = vld [vmem:[%s3 + $0xc4] sm:$0xff]
    %v165 = vld [vmem:[%s3 + $0xcc] sm:$0xff]
    %v166 = vld [vmem:[%s3 + $0xd4] sm:$0xff]
    %v167 = vld [vmem:[%s3 + $0xdc] sm:$0xf]
    %v168 = vld [vmem:[%s3 + $0xe0] sm:$0xff]
    %v169 = vld [vmem:[%s3 + $0xe8] sm:$0xff]
    %v170 = vld [vmem:[%s3 + $0xf0] sm:$0xff]
    %v171 = vld [vmem:[%s3 + $0xf8] sm:$0xf]
    %v172 = vld [vmem:[%s3 + $0xfc] sm:$0xff]
    %v173 = vld [vmem:[%s3 + $0x104] sm:$0xff]
    %v174 = vld [vmem:[%s3 + $0x10c] sm:$0xff]
    %v175 = vld [vmem:[%s3 + $0x114] sm:$0xf]
    %v176 = vld [vmem:[%s3 + $0x118] sm:$0xff]
    %v177 = vld [vmem:[%s3 + $0x120] sm:$0xff]
    %v178 = vld [vmem:[%s3 + $0x128] sm:$0xff]
    %v179 = vld [vmem:[%s3 + $0x130] sm:$0xf]
    %v180 = vld [vmem:[%s3 + $0x134] sm:$0xff]
    %v181 = vld [vmem:[%s3 + $0x13c] sm:$0xff]
    %v182 = vld [vmem:[%s3 + $0x144] sm:$0xff]
    %v183 = vld [vmem:[%s3 + $0x14c] sm:$0xf]
    %v184 = vld [vmem:[%s3 + $0x150] sm:$0xff]
    %v185 = vld [vmem:[%s3 + $0x158] sm:$0xff]
    %v186 = vld [vmem:[%s3 + $0x160] sm:$0xff]
    %v187 = vld [vmem:[%s3 + $0x168] sm:$0xf]
    %v188 = vld [vmem:[%s3 + $0x16c] sm:$0xff]
    %v189 = vld [vmem:[%s3 + $0x174] sm:$0xff]
    %v190 = vld [vmem:[%s3 + $0x17c] sm:$0xff]
    %v191 = vld [vmem:[%s3 + $0x184] sm:$0xf]
    %v192 = vld [vmem:[%s3 + $0x188] sm:$0xff]
    %v193 = vld [vmem:[%s3 + $0x190] sm:$0xff]
    %v194 = vld [vmem:[%s3 + $0x198] sm:$0xff]
    %v195 = vld [vmem:[%s3 + $0x1a0] sm:$0xf]
    %v196 = vld [vmem:[%s3 + $0x1a4] sm:$0xff]
    %v197 = vld [vmem:[%s3 + $0x1ac] sm:$0xff]
    %v198 = vld [vmem:[%s3 + $0x1b4] sm:$0xff]
    %v199 = vld [vmem:[%s3 + $0x1bc] sm:$0xf]
    %v200 = vld [vmem:[%s4] sm:$0x7f]
    %v202 = vlaneseq
    %v203 = vshrl.u32 %v202, 7
    %v204 = vsub.s32 0, %v203
    %v205 = vrot.slane %v200, %v204
    %v206 = vlaneseq
    %v207 = vshrl.u32 %v206, 7
    %v208 = vsub.s32 1, %v207
    %v209 = vrot.slane %v200, %v208
    %v210 = vlaneseq
    %v211 = vshrl.u32 %v210, 7
    %v212 = vsub.s32 2, %v211
    %v213 = vrot.slane %v200, %v212
    %v214 = vlaneseq
    %v215 = vshrl.u32 %v214, 7
    %v216 = vsub.s32 3, %v215
    %v217 = vrot.slane %v200, %v216
    %v218 = vlaneseq
    %v219 = vshrl.u32 %v218, 7
    %v220 = vsub.s32 4, %v219
    %v221 = vrot.slane %v200, %v220
    %v222 = vlaneseq
    %v223 = vshrl.u32 %v222, 7
    %v224 = vsub.s32 5, %v223
    %v225 = vrot.slane %v200, %v224
    %v226 = vlaneseq
    %v227 = vshrl.u32 %v226, 7
    %v228 = vsub.s32 6, %v227
    %v229 = vrot.slane %v200, %v228
    %v301 = vunpack.c.l.b16 %v136
    %v302 = vunpack.c.h.b16 %v136
    %v303 = vunpack.c.l.b16 %v137
    %v304 = vunpack.c.h.b16 %v137
    %v305 = vunpack.c.l.b16 %v138
    %v306 = vunpack.c.h.b16 %v138
    %v307 = vunpack.c.l.b16 %v139
    %v308 = vunpack.c.l.b16 %v140
    %v309 = vunpack.c.h.b16 %v140
    %v310 = vunpack.c.l.b16 %v141
    %v311 = vunpack.c.h.b16 %v141
    %v312 = vunpack.c.l.b16 %v142
    %v313 = vunpack.c.h.b16 %v142
    %v314 = vunpack.c.l.b16 %v143
    %v315 = vunpack.c.l.b16 %v144
    %v316 = vunpack.c.h.b16 %v144
    %v317 = vunpack.c.l.b16 %v145
    %v318 = vunpack.c.h.b16 %v145
    %v319 = vunpack.c.l.b16 %v146
    %v320 = vunpack.c.h.b16 %v146
    %v321 = vunpack.c.l.b16 %v147
    %v322 = vunpack.c.l.b16 %v148
    %v323 = vunpack.c.h.b16 %v148
    %v324 = vunpack.c.l.b16 %v149
    %v325 = vunpack.c.h.b16 %v149
    %v326 = vunpack.c.l.b16 %v150
    %v327 = vunpack.c.h.b16 %v150
    %v328 = vunpack.c.l.b16 %v151
    %v329 = vunpack.c.l.b16 %v152
    %v330 = vunpack.c.h.b16 %v152
    %v331 = vunpack.c.l.b16 %v153
    %v332 = vunpack.c.h.b16 %v153
    %v333 = vunpack.c.l.b16 %v154
    %v334 = vunpack.c.h.b16 %v154
    %v335 = vunpack.c.l.b16 %v155
    %v336 = vunpack.c.l.b16 %v156
    %v337 = vunpack.c.h.b16 %v156
    %v338 = vunpack.c.l.b16 %v157
    %v339 = vunpack.c.h.b16 %v157
    %v340 = vunpack.c.l.b16 %v158
    %v341 = vunpack.c.h.b16 %v158
    %v342 = vunpack.c.l.b16 %v159
    %v343 = vunpack.c.l.b16 %v160
    %v344 = vunpack.c.h.b16 %v160
    %v345 = vunpack.c.l.b16 %v161
    %v346 = vunpack.c.h.b16 %v161
    %v347 = vunpack.c.l.b16 %v162
    %v348 = vunpack.c.h.b16 %v162
    %v349 = vunpack.c.l.b16 %v163
    %v350 = vunpack.c.l.b16 %v164
    %v351 = vunpack.c.h.b16 %v164
    %v352 = vunpack.c.l.b16 %v165
    %v353 = vunpack.c.h.b16 %v165
    %v354 = vunpack.c.l.b16 %v166
    %v355 = vunpack.c.h.b16 %v166
    %v356 = vunpack.c.l.b16 %v167
    %v357 = vunpack.c.l.b16 %v168
    %v358 = vunpack.c.h.b16 %v168
    %v359 = vunpack.c.l.b16 %v169
    %v360 = vunpack.c.h.b16 %v169
    %v361 = vunpack.c.l.b16 %v170
    %v362 = vunpack.c.h.b16 %v170
    %v363 = vunpack.c.l.b16 %v171
    %v364 = vunpack.c.l.b16 %v172
    %v365 = vunpack.c.h.b16 %v172
    %v366 = vunpack.c.l.b16 %v173
    %v367 = vunpack.c.h.b16 %v173
    %v368 = vunpack.c.l.b16 %v174
    %v369 = vunpack.c.h.b16 %v174
    %v370 = vunpack.c.l.b16 %v175
    %v371 = vunpack.c.l.b16 %v176
    %v372 = vunpack.c.h.b16 %v176
    %v373 = vunpack.c.l.b16 %v177
    %v374 = vunpack.c.h.b16 %v177
    %v375 = vunpack.c.l.b16 %v178
    %v376 = vunpack.c.h.b16 %v178
    %v377 = vunpack.c.l.b16 %v179
    %v378 = vunpack.c.l.b16 %v180
    %v379 = vunpack.c.h.b16 %v180
    %v380 = vunpack.c.l.b16 %v181
    %v381 = vunpack.c.h.b16 %v181
    %v382 = vunpack.c.l.b16 %v182
    %v383 = vunpack.c.h.b16 %v182
    %v384 = vunpack.c.l.b16 %v183
    %v385 = vunpack.c.l.b16 %v184
    %v386 = vunpack.c.h.b16 %v184
    %v387 = vunpack.c.l.b16 %v185
    %v388 = vunpack.c.h.b16 %v185
    %v389 = vunpack.c.l.b16 %v186
    %v390 = vunpack.c.h.b16 %v186
    %v391 = vunpack.c.l.b16 %v187
    %v392 = vunpack.c.l.b16 %v188
    %v393 = vunpack.c.h.b16 %v188
    %v394 = vunpack.c.l.b16 %v189
    %v395 = vunpack.c.h.b16 %v189
    %v396 = vunpack.c.l.b16 %v190
    %v397 = vunpack.c.h.b16 %v190
    %v398 = vunpack.c.l.b16 %v191
    %v399 = vunpack.c.l.b16 %v192
    %v400 = vunpack.c.h.b16 %v192
    %v401 = vunpack.c.l.b16 %v193
    %v402 = vunpack.c.h.b16 %v193
    %v403 = vunpack.c.l.b16 %v194
    %v404 = vunpack.c.h.b16 %v194
    %v405 = vunpack.c.l.b16 %v195
    %v406 = vunpack.c.l.b16 %v196
    %v407 = vunpack.c.h.b16 %v196
    %v408 = vunpack.c.l.b16 %v197
    %v409 = vunpack.c.h.b16 %v197
    %v410 = vunpack.c.l.b16 %v198
    %v411 = vunpack.c.h.b16 %v198
    %v412 = vunpack.c.l.b16 %v199
    %v413 = vpack.c.b16 %v308, %v301
    %v414 = vpack.c.b16 %v309, %v302
    %v415 = vpack.c.b16 %v310, %v303
    %v416 = vpack.c.b16 %v311, %v304
    %v417 = vpack.c.b16 %v312, %v305
    %v418 = vpack.c.b16 %v313, %v306
    %v419 = vpack.c.b16 %v314, %v307
    %v420 = vpack.c.b16 %v322, %v315
    %v421 = vpack.c.b16 %v323, %v316
    %v422 = vpack.c.b16 %v324, %v317
    %v423 = vpack.c.b16 %v325, %v318
    %v424 = vpack.c.b16 %v326, %v319
    %v425 = vpack.c.b16 %v327, %v320
    %v426 = vpack.c.b16 %v328, %v321
    %v427 = vpack.c.b16 %v336, %v329
    %v428 = vpack.c.b16 %v337, %v330
    %v429 = vpack.c.b16 %v338, %v331
    %v430 = vpack.c.b16 %v339, %v332
    %v431 = vpack.c.b16 %v340, %v333
    %v432 = vpack.c.b16 %v341, %v334
    %v433 = vpack.c.b16 %v342, %v335
    %v434 = vpack.c.b16 %v350, %v343
    %v435 = vpack.c.b16 %v351, %v344
    %v436 = vpack.c.b16 %v352, %v345
    %v437 = vpack.c.b16 %v353, %v346
    %v438 = vpack.c.b16 %v354, %v347
    %v439 = vpack.c.b16 %v355, %v348
    %v440 = vpack.c.b16 %v356, %v349
    %v441 = vpack.c.b16 %v364, %v357
    %v442 = vpack.c.b16 %v365, %v358
    %v443 = vpack.c.b16 %v366, %v359
    %v444 = vpack.c.b16 %v367, %v360
    %v445 = vpack.c.b16 %v368, %v361
    %v446 = vpack.c.b16 %v369, %v362
    %v447 = vpack.c.b16 %v370, %v363
    %v448 = vpack.c.b16 %v378, %v371
    %v449 = vpack.c.b16 %v379, %v372
    %v450 = vpack.c.b16 %v380, %v373
    %v451 = vpack.c.b16 %v381, %v374
    %v452 = vpack.c.b16 %v382, %v375
    %v453 = vpack.c.b16 %v383, %v376
    %v454 = vpack.c.b16 %v384, %v377
    %v455 = vpack.c.b16 %v392, %v385
    %v456 = vpack.c.b16 %v393, %v386
    %v457 = vpack.c.b16 %v394, %v387
    %v458 = vpack.c.b16 %v395, %v388
    %v459 = vpack.c.b16 %v396, %v389
    %v460 = vpack.c.b16 %v397, %v390
    %v461 = vpack.c.b16 %v398, %v391
    %v462 = vpack.c.b16 %v406, %v399
    %v463 = vpack.c.b16 %v407, %v400
    %v464 = vpack.c.b16 %v408, %v401
    %v465 = vpack.c.b16 %v409, %v402
    %v466 = vpack.c.b16 %v410, %v403
    %v467 = vpack.c.b16 %v411, %v404
    %v468 = vpack.c.b16 %v412, %v405
    %525 = vmatprep.subr.bf16.mxu0 %v463
    %526 = vmatpush1.bf16.msra.mxu0 %v462
    %527 = vmatprep.subr.bf16.mxu0 %v456
    %528 = vmatpush1.bf16.msra.mxu0 %v455
    %529 = vmatprep.subr.bf16.mxu0 %v449
    %530 = vmatpush1.bf16.msra.mxu0 %v448
    %531 = vmatprep.subr.bf16.mxu0 %v442
    %532 = vmatpush1.bf16.msra.mxu0 %v441
    %533 = vmatprep.subr.bf16.mxu0 %v435
    %534 = vmatpush1.bf16.msra.mxu0 %v434
    %535 = vmatprep.subr.bf16.mxu0 %v428
    %536 = vmatpush1.bf16.msra.mxu0 %v427
    %537 = vmatprep.subr.bf16.mxu0 %v421
    %538 = vmatpush1.bf16.msra.mxu0 %v420
    %539 = vmatprep.subr.bf16.mxu0 %v414
    %540 = vmatpush1.bf16.msra.mxu0 %v413
    %541 = vmatprep.subr.bf16.mxu0 0
    %542 = vmatpush2.bf16.msra.mxu0 0
    %543 = vmatprep.subr.bf16.mxu0 0
    %544 = vmatpush2.bf16.msra.mxu0 0
    %545 = vmatprep.subr.bf16.mxu0 0
    %546 = vmatpush2.bf16.msra.mxu0 0
    %547 = vmatprep.subr.bf16.mxu0 0
    %548 = vmatpush2.bf16.msra.mxu0 0
    %549 = vmatprep.subr.bf16.mxu0 0
    %550 = vmatpush2.bf16.msra.mxu0 0
    %551 = vmatprep.subr.bf16.mxu0 0
    %552 = vmatpush2.bf16.msra.mxu0 0
    %553 = vmatprep.subr.bf16.mxu0 0
    %554 = vmatpush2.bf16.msra.mxu0 0
    %555 = vmatprep.subr.bf16.mxu0 0
    %556 = vmatpush2.bf16.msra.mxu0 0
    %557 = vmatprep.mubr.bf16.mxu0 0
    %558 = vmatmul.mubr.bf16.gmra.mxu0 %v135
    %v559 = vpop.f32.mrf.mxu0
    %v560 = vadd.f32 %v205, %v559
    %v561 = vpop.f32.mrf.mxu0
    %v562 = vadd.f32 %v209, %v561
    %v563 = vpop.f32.mrf.mxu0
    %v564 = vpop.f32.mrf.mxu0
    %565 = vdwg.mxu0
    %566 = vmatprep.subr.bf16.mxu0 %v465
    %567 = vmatpush1.bf16.msra.mxu0 %v464
    %568 = vmatprep.subr.bf16.mxu0 %v458
    %569 = vmatpush1.bf16.msra.mxu0 %v457
    %570 = vmatprep.subr.bf16.mxu0 %v451
    %571 = vmatpush1.bf16.msra.mxu0 %v450
    %572 = vmatprep.subr.bf16.mxu0 %v444
    %573 = vmatpush1.bf16.msra.mxu0 %v443
    %574 = vmatprep.subr.bf16.mxu0 %v437
    %575 = vmatpush1.bf16.msra.mxu0 %v436
    %576 = vmatprep.subr.bf16.mxu0 %v430
    %577 = vmatpush1.bf16.msra.mxu0 %v429
    %578 = vmatprep.subr.bf16.mxu0 %v423
    %579 = vmatpush1.bf16.msra.mxu0 %v422
    %580 = vmatprep.subr.bf16.mxu0 %v416
    %581 = vmatpush1.bf16.msra.mxu0 %v415
    %582 = vmatprep.subr.bf16.mxu0 0
    %583 = vmatpush2.bf16.msra.mxu0 0
    %584 = vmatprep.subr.bf16.mxu0 0
    %585 = vmatpush2.bf16.msra.mxu0 0
    %586 = vmatprep.subr.bf16.mxu0 0
    %587 = vmatpush2.bf16.msra.mxu0 0
    %588 = vmatprep.subr.bf16.mxu0 0
    %589 = vmatpush2.bf16.msra.mxu0 0
    %590 = vmatprep.subr.bf16.mxu0 0
    %591 = vmatpush2.bf16.msra.mxu0 0
    %592 = vmatprep.subr.bf16.mxu0 0
    %593 = vmatpush2.bf16.msra.mxu0 0
    %594 = vmatprep.subr.bf16.mxu0 0
    %595 = vmatpush2.bf16.msra.mxu0 0
    %596 = vmatprep.subr.bf16.mxu0 0
    %597 = vmatpush2.bf16.msra.mxu0 0
    %598 = vmatprep.mubr.bf16.mxu0 0
    %599 = vmatmul.mubr.bf16.gmra.mxu0 %v135
    %v600 = vpop.f32.mrf.mxu0
    %v601 = vadd.f32 %v213, %v600
    %v602 = vpop.f32.mrf.mxu0
    %v603 = vadd.f32 %v217, %v602
    %v604 = vpop.f32.mrf.mxu0
    %v605 = vpop.f32.mrf.mxu0
    %606 = vdwg.mxu0
    %607 = vmatprep.subr.bf16.mxu0 %v467
    %608 = vmatpush1.bf16.msra.mxu0 %v466
    %609 = vmatprep.subr.bf16.mxu0 %v460
    %610 = vmatpush1.bf16.msra.mxu0 %v459
    %611 = vmatprep.subr.bf16.mxu0 %v453
    %612 = vmatpush1.bf16.msra.mxu0 %v452
    %613 = vmatprep.subr.bf16.mxu0 %v446
    %614 = vmatpush1.bf16.msra.mxu0 %v445
    %615 = vmatprep.subr.bf16.mxu0 %v439
    %616 = vmatpush1.bf16.msra.mxu0 %v438
    %617 = vmatprep.subr.bf16.mxu0 %v432
    %618 = vmatpush1.bf16.msra.mxu0 %v431
    %619 = vmatprep.subr.bf16.mxu0 %v425
    %620 = vmatpush1.bf16.msra.mxu0 %v424
    %621 = vmatprep.subr.bf16.mxu0 %v418
    %622 = vmatpush1.bf16.msra.mxu0 %v417
    %623 = vmatprep.subr.bf16.mxu0 0
    %624 = vmatpush2.bf16.msra.mxu0 0
    %625 = vmatprep.subr.bf16.mxu0 0
    %626 = vmatpush2.bf16.msra.mxu0 0
    %627 = vmatprep.subr.bf16.mxu0 0
    %628 = vmatpush2.bf16.msra.mxu0 0
    %629 = vmatprep.subr.bf16.mxu0 0
    %630 = vmatpush2.bf16.msra.mxu0 0
    %631 = vmatprep.subr.bf16.mxu0 0
    %632 = vmatpush2.bf16.msra.mxu0 0
    %633 = vmatprep.subr.bf16.mxu0 0
    %634 = vmatpush2.bf16.msra.mxu0 0
    %635 = vmatprep.subr.bf16.mxu0 0
    %636 = vmatpush2.bf16.msra.mxu0 0
    %637 = vmatprep.subr.bf16.mxu0 0
    %638 = vmatpush2.bf16.msra.mxu0 0
    %639 = vmatprep.mubr.bf16.mxu0 0
    %640 = vmatmul.mubr.bf16.gmra.mxu0 %v135
    %v641 = vpop.f32.mrf.mxu0
    %v642 = vadd.f32 %v221, %v641
    %v643 = vpop.f32.mrf.mxu0
    %v644 = vadd.f32 %v225, %v643
    %v645 = vpop.f32.mrf.mxu0
    %v646 = vpop.f32.mrf.mxu0
    %647 = vdwg.mxu0
    %648 = vmatprep.subr.bf16.mxu0 0
    %649 = vmatpush1.bf16.msra.mxu0 %v468
    %650 = vmatprep.subr.bf16.mxu0 0
    %651 = vmatpush1.bf16.msra.mxu0 %v461
    %652 = vmatprep.subr.bf16.mxu0 0
    %653 = vmatpush1.bf16.msra.mxu0 %v454
    %654 = vmatprep.subr.bf16.mxu0 0
    %655 = vmatpush1.bf16.msra.mxu0 %v447
    %656 = vmatprep.subr.bf16.mxu0 0
    %657 = vmatpush1.bf16.msra.mxu0 %v440
    %658 = vmatprep.subr.bf16.mxu0 0
    %659 = vmatpush1.bf16.msra.mxu0 %v433
    %660 = vmatprep.subr.bf16.mxu0 0
    %661 = vmatpush1.bf16.msra.mxu0 %v426
    %662 = vmatprep.subr.bf16.mxu0 0
    %663 = vmatpush1.bf16.msra.mxu0 %v419
    %664 = vmatprep.subr.bf16.mxu0 0
    %665 = vmatpush2.bf16.msra.mxu0 0
    %666 = vmatprep.subr.bf16.mxu0 0
    %667 = vmatpush2.bf16.msra.mxu0 0
    %668 = vmatprep.subr.bf16.mxu0 0
    %669 = vmatpush2.bf16.msra.mxu0 0
    %670 = vmatprep.subr.bf16.mxu0 0
    %671 = vmatpush2.bf16.msra.mxu0 0
    %672 = vmatprep.subr.bf16.mxu0 0
    %673 = vmatpush2.bf16.msra.mxu0 0
    %674 = vmatprep.subr.bf16.mxu0 0
    %675 = vmatpush2.bf16.msra.mxu0 0
    %676 = vmatprep.subr.bf16.mxu0 0
    %677 = vmatpush2.bf16.msra.mxu0 0
    %678 = vmatprep.subr.bf16.mxu0 0
    %679 = vmatpush2.bf16.msra.mxu0 0
    %680 = vmatprep.mubr.bf16.mxu0 0
    %681 = vmatmul.mubr.bf16.gmra.mxu0 %v135
    %v682 = vpop.f32.mrf.mxu0
    %v683 = vadd.f32 %v229, %v682
    %v684 = vpop.f32.mrf.mxu0
    %v685 = vpop.f32.mrf.mxu0
    %v686 = vpop.f32.mrf.mxu0
    %687 = vdwg.mxu0
    %v688 = vmul.f32 %v560, 0.5
    %v689 = vmul.f32 %v562, 0.5
    %v690 = vmul.f32 %v601, 0.5
    %v691 = vmul.f32 %v603, 0.5
    %v692 = vmul.f32 %v642, 0.5
    %v693 = vmul.f32 %v644, 0.5
    %v694 = vmul.f32 %v683, 0.5
    %v695 = vtanh.pop %v688
    %v696 = vtanh.pop %v689
    %v697 = vtanh.pop %v690
    %v698 = vtanh.pop %v691
    %v699 = vtanh.pop %v692
    %v700 = vtanh.pop %v693
    %v701 = vtanh.pop %v694
    %v702 = vmul.f32 %v695, 0.5
    %v703 = vmul.f32 %v696, 0.5
    %v704 = vmul.f32 %v697, 0.5
    %v705 = vmul.f32 %v698, 0.5
    %v706 = vmul.f32 %v699, 0.5
    %v707 = vmul.f32 %v700, 0.5
    %v708 = vmul.f32 %v701, 0.5
    %v709 = vadd.f32 %v702, 0.5
    %v710 = vadd.f32 %v703, 0.5
    %v711 = vadd.f32 %v704, 0.5
    %v712 = vadd.f32 %v705, 0.5
    %v713 = vadd.f32 %v706, 0.5
    %v714 = vadd.f32 %v707, 0.5
    %v715 = vadd.f32 %v708, 0.5
    %v716 = vpack.c.bf16 %v709, %v709
    %v717 = vpack.c.bf16 %v710, %v710
    %v718 = vpack.c.bf16 %v711, %v711
    %v719 = vpack.c.bf16 %v712, %v712
    %v720 = vpack.c.bf16 %v713, %v713
    %v721 = vpack.c.bf16 %v714, %v714
    %v722 = vpack.c.bf16 %v715, %v715
    %v730 = vunpack.c.l.b16 %v716
    %v731 = vunpack.c.l.b16 %v717
    %v732 = vunpack.c.l.b16 %v718
    %v733 = vunpack.c.l.b16 %v719
    %v734 = vunpack.c.l.b16 %v720
    %v735 = vunpack.c.l.b16 %v721
    %v736 = vunpack.c.l.b16 %v722
    %v737 = vpack.c.b16 %v731, %v730
    %v738 = vpack.c.b16 %v733, %v732
    %v739 = vpack.c.b16 %v735, %v734
    %v740 = vpack.c.b16 %v736, %v736
    %745 = vst [vmem:[#allocation2] sm:$0xff] %v737
    %746 = vst [vmem:[#allocation2 + $0x8] sm:$0xff] %v738
    %747 = vst [vmem:[#allocation2 + $0x10] sm:$0xff] %v739
    %vm748 = vcmask 125952
    %749 = vst.msk [vmem:[#allocation2 + $0x18] sm:$0xf] %vm748, %v740
    // Predicated region
    $region22: #{tpu_custom_call.1} parent=1 // pred_check
      _
    $region23: #{tpu_custom_call.1} parent=1 // pred_check_branch
      %751 = sbr.rel (0) target = $region25
    $region24: #{tpu_custom_call.1} parent=1 // pred_region
      %s753 = ssub.s32 448, 448
      %754 = vsyncadd [#allocation3], %s753
      %s756 = sshll.u32 [#allocation2], 4
      %s757 = int_to_ptr.vmem [resolvable:$true] %s756
      %759 = dma.vmem_to_hbm [thread:$0]  %s757, 448, %s5, [#allocation3]
    $region25: #{tpu_custom_call.1} parent=1 // pred_fallthru
      _
    // Predicated region
    $region26: #{tpu_custom_call.1} parent=1 // pred_check
      _
    $region27: #{tpu_custom_call.1} parent=1 // pred_check_branch
      %761 = sbr.rel (0) target = $region29
    $region28: #{tpu_custom_call.1} parent=1 // pred_region
      %762 = dma.done [#allocation3], 448
    $region29: #{tpu_custom_call.1} parent=1 // pred_fallthru
      _
    %763 = vsyncpa [#allocation3], 1

</llo_original>
